<compile_context>
chip_gen: v5e
topology: v5e:2x2
jax: 0.10.0
libtpu: 0.0.40
codegen_flags: <defaults>
</compile_context>

<pallas_src>
import math

import jax
import jax.numpy as jnp
from jax import lax
from jax.experimental import pallas as pl
from jax.experimental.pallas import tpu as pltpu

NUM_GROUPS = 8
EPS = 1e-5


def _kv_chunk(n):
    """Largest KV chunk (multiple of 128, <= 512) that divides n; else the full axis."""
    if n <= 512:
        return n
    for t in (512, 384, 256, 128):
        if n % t == 0:
            return t
    return n


def _attention_block_kernel(x_ref, gamma_ref, beta_ref, og_ref, oc_ref,
                            wqkv_ref, bqkv_ref, wout_ref, bout_ref, o_ref):
    x = x_ref[...]                                   # (C, N) f32
    c, n = x.shape
    group_size = c // NUM_GROUPS
    inv_cnt = 1.0 / float(n * group_size)

    # ---- GroupNorm(8, C) ----------------------------------------------------
    # Per-channel sums (lane reduction), tiny one-hot matmuls to aggregate per
    # group and to broadcast the group stats back per channel, then one fused
    # scale/shift on the big (C, N) slab.
    s = jnp.sum(x, axis=1, keepdims=True)            # (C, 1)
    sq = jnp.sum(x * x, axis=1, keepdims=True)       # (C, 1)
    gs = jnp.dot(og_ref[...], s, preferred_element_type=jnp.float32)    # (G, 1)
    gsq = jnp.dot(og_ref[...], sq, preferred_element_type=jnp.float32)  # (G, 1)
    mean_g = gs * inv_cnt
    var_g = jnp.maximum(gsq * inv_cnt - mean_g * mean_g, 0.0)
    rstd_g = lax.rsqrt(var_g + EPS)
    mean_c = jnp.dot(oc_ref[...], mean_g, preferred_element_type=jnp.float32)  # (C, 1)
    rstd_c = jnp.dot(oc_ref[...], rstd_g, preferred_element_type=jnp.float32)  # (C, 1)
    a_c = rstd_c * gamma_ref[...]                    # (C, 1)
    b_c = beta_ref[...] - mean_c * a_c               # (C, 1)
    h = x * a_c + b_c                                # (C, N)

    # ---- to_qkv: (3C, C) @ (C, N) + bias, bf16 MXU / f32 accumulate ---------
    qkv = jnp.dot(wqkv_ref[...], h.astype(jnp.bfloat16),
                  preferred_element_type=jnp.float32) + bqkv_ref[...]   # (3C, N)

    scale = 1.0 / math.sqrt(c)
    q = (qkv[:c] * scale).astype(jnp.bfloat16)               # (C, N) pre-scaled
    kT = jnp.transpose(qkv[c:2 * c]).astype(jnp.bfloat16)    # (N, C) one XLU transpose
    v = qkv[2 * c:].astype(jnp.bfloat16)                     # (C, N)

    # ---- attention: online softmax over KV chunks ---------------------------
    # Logits live as (tkv, N) tiles: keys on sublanes, queries on lanes, so the
    # softmax reduction is a sublane reduce and v @ p needs no extra transpose.
    tkv = _kv_chunk(n)

    def logits(j0):
        return jnp.dot(kT[j0:j0 + tkv, :], q,
                       preferred_element_type=jnp.float32)   # (tkv, N) f32

    s0 = logits(0)
    m_i = jnp.max(s0, axis=0, keepdims=True)                 # (1, N)
    p0 = jnp.exp(s0 - m_i)
    l_i = jnp.sum(p0, axis=0, keepdims=True)                 # (1, N)
    acc = jnp.dot(v[:, :tkv], p0.astype(jnp.bfloat16),
                  preferred_element_type=jnp.float32)        # (C, N)

    for ci in range(1, n // tkv):                            # static unroll
        j0 = ci * tkv
        sc = logits(j0)
        m_new = jnp.maximum(m_i, jnp.max(sc, axis=0, keepdims=True))
        alpha = jnp.exp(m_i - m_new)
        pc = jnp.exp(sc - m_new)
        l_i = alpha * l_i + jnp.sum(pc, axis=0, keepdims=True)
        acc = alpha * acc + jnp.dot(v[:, j0:j0 + tkv], pc.astype(jnp.bfloat16),
                                    preferred_element_type=jnp.float32)
        m_i = m_new

    h2 = acc * pl.reciprocal(l_i, approx=True)               # (C, N)

    # ---- to_out: (C, C) @ (C, N) + bias, then residual ----------------------
    out = jnp.dot(wout_ref[...], h2.astype(jnp.bfloat16),
                  preferred_element_type=jnp.float32) + bout_ref[...]
    o_ref[...] = out + x


def attention_block(x, params):
    """x: (B, C, N) float32.  Returns (B, C, N) float32."""
    b, c, n = x.shape
    assert c % NUM_GROUPS == 0, "channels must be divisible by the 8 GroupNorm groups"
    g = NUM_GROUPS

    gamma = params["gamma"].reshape(c, 1).astype(jnp.float32)
    beta = params["beta"].reshape(c, 1).astype(jnp.float32)
    # conv weights resident in VMEM as bf16; biases stay f32 (added post-matmul)
    w_qkv = params["w_qkv"].astype(jnp.bfloat16)              # (3C, C)
    b_qkv = params["b_qkv"].reshape(3 * c, 1).astype(jnp.float32)
    w_out = params["w_out"].astype(jnp.bfloat16)              # (C, C)
    b_out = params["b_out"].reshape(c, 1).astype(jnp.float32)

    # tiny one-hot group maps for GroupNorm aggregation / broadcast
    ch_group = jnp.arange(c) // (c // g)
    onehot_gc = (jnp.arange(g)[:, None] == ch_group[None, :]).astype(jnp.float32)  # (G, C)
    onehot_cg = (ch_group[:, None] == jnp.arange(g)[None, :]).astype(jnp.float32)  # (C, G)

    full2 = lambda i: (0, 0)
    grid_spec = pltpu.PrefetchScalarGridSpec(
        num_scalar_prefetch=0,
        grid=(b,),
        in_specs=[
            pl.BlockSpec((None, c, n), lambda i: (i, 0, 0)),   # x, batch dim squeezed
            pl.BlockSpec((c, 1), full2),                       # gamma
            pl.BlockSpec((c, 1), full2),                       # beta
            pl.BlockSpec((g, c), full2),                       # one-hot (G, C)
            pl.BlockSpec((c, g), full2),                       # one-hot (C, G)
            pl.BlockSpec((3 * c, c), full2),                   # w_qkv (bf16)
            pl.BlockSpec((3 * c, 1), full2),                   # b_qkv
            pl.BlockSpec((c, c), full2),                       # w_out (bf16)
            pl.BlockSpec((c, 1), full2),                       # b_out
        ],
        out_specs=pl.BlockSpec((None, c, n), lambda i: (i, 0, 0)),
    )

    # scoped-VMEM budget: >= 32 MiB, grows with the problem size, capped at the
    # v7x physical VMEM (64 MiB) so the request is legal on every chip.
    tkv = _kv_chunk(n)
    est = (4 * c * n * 4            # x in + out, double-buffered
           + 3 * c * n * 4          # qkv (f32)
           + c * n * 4              # h
           + 3 * c * n * 2          # q / kT / v (bf16)
           + 2 * tkv * n * 4        # logits + probs tile
           + c * n * 4              # accumulator
           + 2 * (3 * c * c + c * c) * 2   # double-buffered bf16 weights
           + (1 << 20))
    vmem_limit = int(min(max(2 * est, 32 * 1024 * 1024), 64 * 1024 * 1024))

    return pl.pallas_call(
        _attention_block_kernel,
        out_shape=jax.ShapeDtypeStruct((b, c, n), jnp.float32),
        grid_spec=grid_spec,
        compiler_params=pltpu.CompilerParams(
            dimension_semantics=("parallel",),
            vmem_limit_bytes=vmem_limit),
    )(x, gamma, beta, onehot_gc, onehot_cg, w_qkv, b_qkv, w_out, b_out)


def attention_block_reference(x, params):
    """Pure-JAX f32 reference matching the PyTorch forward semantics."""
    b, c, n = x.shape
    gamma, beta, w_qkv, b_qkv, w_out, b_out = (
        params["gamma"], params["beta"], params["w_qkv"], params["b_qkv"],
        params["w_out"], params["b_out"])
    xg = x.reshape(b, NUM_GROUPS, c // NUM_GROUPS, n)
    mean = jnp.mean(xg, axis=(2, 3), keepdims=True)
    var = jnp.mean((xg - mean) ** 2, axis=(2, 3), keepdims=True)
    h = ((xg - mean) / jnp.sqrt(var + EPS)).reshape(b, c, n)
    h = h * gamma.reshape(1, c, 1) + beta.reshape(1, c, 1)
    qkv = jnp.einsum("oc,bcn->bon", w_qkv, h) + b_qkv.reshape(1, -1, 1)
    q, k, v = qkv[:, :c], qkv[:, c:2 * c], qkv[:, 2 * c:]
    attn = jnp.einsum("bci,bcj->bij", q, k) / math.sqrt(c)
    attn = jax.nn.softmax(attn, axis=-1)
    h2 = jnp.einsum("bcj,bij->bci", v, attn)
    out = jnp.einsum("oc,bcn->bon", w_out, h2) + b_out.reshape(1, -1, 1)
    return out + x


def init_params(key, channels):
    k1, k2, k3, k4, k5, k6 = jax.random.split(key, 6)
    return {
        "gamma": 1.0 + 0.1 * jax.random.normal(k1, (channels,), jnp.float32),
        "beta": 0.1 * jax.random.normal(k2, (channels,), jnp.float32),
        # Conv1d(channels, 3*channels, 1): weight (3C, C, 1) squeezed to (3C, C)
        "w_qkv": 0.1 * jax.random.normal(k3, (3 * channels, channels), jnp.float32),
        "b_qkv": 0.1 * jax.random.normal(k4, (3 * channels,), jnp.float32),
        # Conv1d(channels, channels, 1): weight (C, C)
        "w_out": 0.1 * jax.random.normal(k5, (channels, channels), jnp.float32),
        "b_out": 0.1 * jax.random.normal(k6, (channels,), jnp.float32),
    }


if __name__ == "__main__":
    key = jax.random.PRNGKey(0)
    kx, kp = jax.random.split(key)

    B, C, N = 2, 32, 128
    x = jax.random.normal(kx, (B, C, N), jnp.float32)
    params = init_params(kp, C)

    out = jax.block_until_ready(attention_block(x, params))
    ref = jax.block_until_ready(attention_block_reference(x, params))

    # bf16 MXU path -> looser tolerance than a pure-f32 compare.
    if not jnp.allclose(out, ref, rtol=3e-2, atol=3e-2):
        max_err = float(jnp.max(jnp.abs(out - ref)))
        raise AssertionError(f"Pallas kernel mismatch vs reference, max err {max_err}")

    print("KERNEL_OK")
</pallas_src>

<mosaic_0001>
module attributes {stable_mosaic.version = 11 : i64} {
  func.func @_attention_block_kernel(%arg0: i32, %arg1: memref<1x32x128xf32, #tpu.memory_space<vmem>>, %arg2: memref<32x1xf32, #tpu.memory_space<vmem>>, %arg3: memref<32x1xf32, #tpu.memory_space<vmem>>, %arg4: memref<8x32xf32, #tpu.memory_space<vmem>>, %arg5: memref<32x8xf32, #tpu.memory_space<vmem>>, %arg6: memref<96x32xbf16, #tpu.memory_space<vmem>>, %arg7: memref<96x1xf32, #tpu.memory_space<vmem>>, %arg8: memref<32x32xbf16, #tpu.memory_space<vmem>>, %arg9: memref<32x1xf32, #tpu.memory_space<vmem>>, %arg10: memref<1x32x128xf32, #tpu.memory_space<vmem>>) attributes {dimension_semantics = [#tpu.dimension_semantics<parallel>], iteration_bounds = array<i64: 2>, scalar_prefetch = 0 : i64, scratch_operands = 0 : i64, tpu.core_type = #tpu.core_type<tc>, window_params = [{transform_indices = @transform_0, window_bounds = array<i64: 1, 32, 128>}, {pipeline_mode = #tpu.pipeline_mode<synchronous>, transform_indices = @transform_1, window_bounds = array<i64: 32, 1>}, {pipeline_mode = #tpu.pipeline_mode<synchronous>, transform_indices = @transform_2, window_bounds = array<i64: 32, 1>}, {pipeline_mode = #tpu.pipeline_mode<synchronous>, transform_indices = @transform_3, window_bounds = array<i64: 8, 32>}, {pipeline_mode = #tpu.pipeline_mode<synchronous>, transform_indices = @transform_4, window_bounds = array<i64: 32, 8>}, {pipeline_mode = #tpu.pipeline_mode<synchronous>, transform_indices = @transform_5, window_bounds = array<i64: 96, 32>}, {pipeline_mode = #tpu.pipeline_mode<synchronous>, transform_indices = @transform_6, window_bounds = array<i64: 96, 1>}, {pipeline_mode = #tpu.pipeline_mode<synchronous>, transform_indices = @transform_7, window_bounds = array<i64: 32, 32>}, {pipeline_mode = #tpu.pipeline_mode<synchronous>, transform_indices = @transform_8, window_bounds = array<i64: 32, 1>}, {transform_indices = @transform_9, window_bounds = array<i64: 1, 32, 128>}]} {
    %c0 = arith.constant 0 : index
    %c0_0 = arith.constant 0 : index
    %c0_1 = arith.constant 0 : index
    %0 = vector.load %arg1[%c0, %c0_0, %c0_1] : memref<1x32x128xf32, #tpu.memory_space<vmem>>, vector<1x32x128xf32>
    %1 = vector.shape_cast %0 : vector<1x32x128xf32> to vector<32x128xf32>
    %cst = arith.constant dense<0.000000e+00> : vector<32xf32>
    %2 = vector.multi_reduction <add>, %1, %cst [1] : vector<32x128xf32> to vector<32xf32>
    %3 = vector.shape_cast %2 : vector<32xf32> to vector<32x1xf32>
    %4 = arith.mulf %1, %1 : vector<32x128xf32>
    %cst_2 = arith.constant dense<0.000000e+00> : vector<32xf32>
    %5 = vector.multi_reduction <add>, %4, %cst_2 [1] : vector<32x128xf32> to vector<32xf32>
    %6 = vector.shape_cast %5 : vector<32xf32> to vector<32x1xf32>
    %c0_3 = arith.constant 0 : index
    %c0_4 = arith.constant 0 : index
    %7 = vector.load %arg4[%c0_3, %c0_4] : memref<8x32xf32, #tpu.memory_space<vmem>>, vector<8x32xf32>
    %cst_5 = arith.constant dense<0.000000e+00> : vector<8x1xf32>
    %8 = tpu.matmul %7, %3, %cst_5 {dimension_numbers = #tpu.dot_dimension_numbers<[1], [0], [0], [1], [0, 0, 1, 1], [], []>} : vector<8x32xf32>, vector<32x1xf32>, vector<8x1xf32> -> vector<8x1xf32>
    %c0_6 = arith.constant 0 : index
    %c0_7 = arith.constant 0 : index
    %9 = vector.load %arg4[%c0_6, %c0_7] : memref<8x32xf32, #tpu.memory_space<vmem>>, vector<8x32xf32>
    %cst_8 = arith.constant dense<0.000000e+00> : vector<8x1xf32>
    %10 = tpu.matmul %9, %6, %cst_8 {dimension_numbers = #tpu.dot_dimension_numbers<[1], [0], [0], [1], [0, 0, 1, 1], [], []>} : vector<8x32xf32>, vector<32x1xf32>, vector<8x1xf32> -> vector<8x1xf32>
    %cst_9 = arith.constant 0.001953125 : f32
    %11 = vector.broadcast %cst_9 : f32 to vector<8x1xf32>
    %12 = arith.mulf %8, %11 : vector<8x1xf32>
    %cst_10 = arith.constant 0.001953125 : f32
    %13 = vector.broadcast %cst_10 : f32 to vector<8x1xf32>
    %14 = arith.mulf %10, %13 : vector<8x1xf32>
    %15 = arith.mulf %12, %12 : vector<8x1xf32>
    %16 = arith.subf %14, %15 : vector<8x1xf32>
    %cst_11 = arith.constant 0.000000e+00 : f32
    %17 = vector.broadcast %cst_11 : f32 to vector<8x1xf32>
    %18 = arith.maximumf %16, %17 : vector<8x1xf32>
    %cst_12 = arith.constant 9.99999974E-6 : f32
    %19 = vector.broadcast %cst_12 : f32 to vector<8x1xf32>
    %20 = arith.addf %18, %19 : vector<8x1xf32>
    %21 = math.rsqrt %20 : vector<8x1xf32>
    %c0_13 = arith.constant 0 : index
    %c0_14 = arith.constant 0 : index
    %22 = vector.load %arg5[%c0_13, %c0_14] : memref<32x8xf32, #tpu.memory_space<vmem>>, vector<32x8xf32>
    %cst_15 = arith.constant dense<0.000000e+00> : vector<32x1xf32>
    %23 = tpu.matmul %22, %12, %cst_15 {dimension_numbers = #tpu.dot_dimension_numbers<[1], [0], [0], [1], [0, 0, 1, 1], [], []>} : vector<32x8xf32>, vector<8x1xf32>, vector<32x1xf32> -> vector<32x1xf32>
    %c0_16 = arith.constant 0 : index
    %c0_17 = arith.constant 0 : index
    %24 = vector.load %arg5[%c0_16, %c0_17] : memref<32x8xf32, #tpu.memory_space<vmem>>, vector<32x8xf32>
    %cst_18 = arith.constant dense<0.000000e+00> : vector<32x1xf32>
    %25 = tpu.matmul %24, %21, %cst_18 {dimension_numbers = #tpu.dot_dimension_numbers<[1], [0], [0], [1], [0, 0, 1, 1], [], []>} : vector<32x8xf32>, vector<8x1xf32>, vector<32x1xf32> -> vector<32x1xf32>
    %c0_19 = arith.constant 0 : index
    %c0_20 = arith.constant 0 : index
    %26 = vector.load %arg2[%c0_19, %c0_20] : memref<32x1xf32, #tpu.memory_space<vmem>>, vector<32x1xf32>
    %27 = arith.mulf %25, %26 : vector<32x1xf32>
    %c0_21 = arith.constant 0 : index
    %c0_22 = arith.constant 0 : index
    %28 = vector.load %arg3[%c0_21, %c0_22] : memref<32x1xf32, #tpu.memory_space<vmem>>, vector<32x1xf32>
    %29 = arith.mulf %23, %27 : vector<32x1xf32>
    %30 = arith.subf %28, %29 : vector<32x1xf32>
    %31 = vector.broadcast %27 : vector<32x1xf32> to vector<32x128xf32>
    %32 = arith.mulf %1, %31 : vector<32x128xf32>
    %33 = vector.broadcast %30 : vector<32x1xf32> to vector<32x128xf32>
    %34 = arith.addf %32, %33 : vector<32x128xf32>
    %c0_23 = arith.constant 0 : index
    %c0_24 = arith.constant 0 : index
    %35 = vector.load %arg6[%c0_23, %c0_24] : memref<96x32xbf16, #tpu.memory_space<vmem>>, vector<96x32xbf16>
    %36 = arith.truncf %34 : vector<32x128xf32> to vector<32x128xbf16>
    %cst_25 = arith.constant dense<0.000000e+00> : vector<96x128xf32>
    %37 = tpu.matmul %35, %36, %cst_25 {dimension_numbers = #tpu.dot_dimension_numbers<[1], [0], [0], [1], [0, 0, 1, 1], [], []>} : vector<96x32xbf16>, vector<32x128xbf16>, vector<96x128xf32> -> vector<96x128xf32>
    %c0_26 = arith.constant 0 : index
    %c0_27 = arith.constant 0 : index
    %38 = vector.load %arg7[%c0_26, %c0_27] : memref<96x1xf32, #tpu.memory_space<vmem>>, vector<96x1xf32>
    %39 = vector.broadcast %38 : vector<96x1xf32> to vector<96x128xf32>
    %40 = arith.addf %37, %39 : vector<96x128xf32>
    %41 = vector.extract_strided_slice %40 {offsets = [0, 0], sizes = [32, 128], strides = [1, 1]} : vector<96x128xf32> to vector<32x128xf32>
    %cst_28 = arith.constant 0.176776692 : f32
    %42 = vector.broadcast %cst_28 : f32 to vector<32x128xf32>
    %43 = arith.mulf %41, %42 : vector<32x128xf32>
    %44 = arith.truncf %43 : vector<32x128xf32> to vector<32x128xbf16>
    %45 = vector.extract_strided_slice %40 {offsets = [32, 0], sizes = [32, 128], strides = [1, 1]} : vector<96x128xf32> to vector<32x128xf32>
    %46 = tpu.transpose %45, [1, 0] : vector<32x128xf32> -> vector<128x32xf32>
    %47 = arith.truncf %46 : vector<128x32xf32> to vector<128x32xbf16>
    %48 = vector.extract_strided_slice %40 {offsets = [64, 0], sizes = [32, 128], strides = [1, 1]} : vector<96x128xf32> to vector<32x128xf32>
    %49 = arith.truncf %48 : vector<32x128xf32> to vector<32x128xbf16>
    %cst_29 = arith.constant dense<0.000000e+00> : vector<128x128xf32>
    %50 = tpu.matmul %47, %44, %cst_29 {dimension_numbers = #tpu.dot_dimension_numbers<[1], [0], [0], [1], [0, 0, 1, 1], [], []>} : vector<128x32xbf16>, vector<32x128xbf16>, vector<128x128xf32> -> vector<128x128xf32>
    %cst_30 = arith.constant dense<0xFF800000> : vector<128xf32>
    %51 = vector.multi_reduction <maximumf>, %50, %cst_30 [0] : vector<128x128xf32> to vector<128xf32>
    %52 = vector.shape_cast %51 : vector<128xf32> to vector<1x128xf32>
    %53 = vector.broadcast %52 : vector<1x128xf32> to vector<128x128xf32>
    %54 = arith.subf %50, %53 : vector<128x128xf32>
    %55 = math.exp %54 : vector<128x128xf32>
    %cst_31 = arith.constant dense<0.000000e+00> : vector<128xf32>
    %56 = vector.multi_reduction <add>, %55, %cst_31 [0] : vector<128x128xf32> to vector<128xf32>
    %57 = vector.shape_cast %56 : vector<128xf32> to vector<1x128xf32>
    %58 = arith.truncf %55 : vector<128x128xf32> to vector<128x128xbf16>
    %cst_32 = arith.constant dense<0.000000e+00> : vector<32x128xf32>
    %59 = tpu.matmul %49, %58, %cst_32 {dimension_numbers = #tpu.dot_dimension_numbers<[1], [0], [0], [1], [0, 0, 1, 1], [], []>} : vector<32x128xbf16>, vector<128x128xbf16>, vector<32x128xf32> -> vector<32x128xf32>
    %60 = tpu.reciprocal %57 {approx = true} : vector<1x128xf32> -> vector<1x128xf32>
    %61 = vector.broadcast %60 : vector<1x128xf32> to vector<32x128xf32>
    %62 = arith.mulf %59, %61 : vector<32x128xf32>
    %c0_33 = arith.constant 0 : index
    %c0_34 = arith.constant 0 : index
    %63 = vector.load %arg8[%c0_33, %c0_34] : memref<32x32xbf16, #tpu.memory_space<vmem>>, vector<32x32xbf16>
    %64 = arith.truncf %62 : vector<32x128xf32> to vector<32x128xbf16>
    %cst_35 = arith.constant dense<0.000000e+00> : vector<32x128xf32>
    %65 = tpu.matmul %63, %64, %cst_35 {dimension_numbers = #tpu.dot_dimension_numbers<[1], [0], [0], [1], [0, 0, 1, 1], [], []>} : vector<32x32xbf16>, vector<32x128xbf16>, vector<32x128xf32> -> vector<32x128xf32>
    %c0_36 = arith.constant 0 : index
    %c0_37 = arith.constant 0 : index
    %66 = vector.load %arg9[%c0_36, %c0_37] : memref<32x1xf32, #tpu.memory_space<vmem>>, vector<32x1xf32>
    %67 = vector.broadcast %66 : vector<32x1xf32> to vector<32x128xf32>
    %68 = arith.addf %65, %67 : vector<32x128xf32>
    %69 = arith.addf %68, %1 : vector<32x128xf32>
    %c0_38 = arith.constant 0 : index
    %c0_39 = arith.constant 0 : index
    %c0_40 = arith.constant 0 : index
    %70 = vector.load %arg10[%c0_38, %c0_39, %c0_40] : memref<1x32x128xf32, #tpu.memory_space<vmem>>, vector<1x32x128xf32>
    %71 = vector.shape_cast %70 : vector<1x32x128xf32> to vector<32x128xf32>
    %72 = vector.shape_cast %69 : vector<32x128xf32> to vector<1x32x128xf32>
    tpu.vector_store %arg10[%c0_38, %c0_39, %c0_40], %72 {strides = array<i32>} : memref<1x32x128xf32, #tpu.memory_space<vmem>>, vector<1x32x128xf32>,
    return
  }
  func.func @transform_0(%arg0: i32) -> (i32, i32, i32) {
    %c0_i32 = arith.constant 0 : i32
    %c0_i32_0 = arith.constant 0 : i32
    %c0_i32_1 = arith.constant 0 : i32
    return %arg0, %c0_i32, %c0_i32_0 : i32, i32, i32
  }
  func.func @transform_1(%arg0: i32) -> (i32, i32) {
    %c0_i32 = arith.constant 0 : i32
    %c0_i32_0 = arith.constant 0 : i32
    %c0_i32_1 = arith.constant 0 : i32
    return %c0_i32, %c0_i32_0 : i32, i32
  }
  func.func @transform_2(%arg0: i32) -> (i32, i32) {
    %c0_i32 = arith.constant 0 : i32
    %c0_i32_0 = arith.constant 0 : i32
    %c0_i32_1 = arith.constant 0 : i32
    return %c0_i32, %c0_i32_0 : i32, i32
  }
  func.func @transform_3(%arg0: i32) -> (i32, i32) {
    %c0_i32 = arith.constant 0 : i32
    %c0_i32_0 = arith.constant 0 : i32
    %c0_i32_1 = arith.constant 0 : i32
    return %c0_i32, %c0_i32_0 : i32, i32
  }
  func.func @transform_4(%arg0: i32) -> (i32, i32) {
    %c0_i32 = arith.constant 0 : i32
    %c0_i32_0 = arith.constant 0 : i32
    %c0_i32_1 = arith.constant 0 : i32
    return %c0_i32, %c0_i32_0 : i32, i32
  }
  func.func @transform_5(%arg0: i32) -> (i32, i32) {
    %c0_i32 = arith.constant 0 : i32
    %c0_i32_0 = arith.constant 0 : i32
    %c0_i32_1 = arith.constant 0 : i32
    return %c0_i32, %c0_i32_0 : i32, i32
  }
  func.func @transform_6(%arg0: i32) -> (i32, i32) {
    %c0_i32 = arith.constant 0 : i32
    %c0_i32_0 = arith.constant 0 : i32
    %c0_i32_1 = arith.constant 0 : i32
    return %c0_i32, %c0_i32_0 : i32, i32
  }
  func.func @transform_7(%arg0: i32) -> (i32, i32) {
    %c0_i32 = arith.constant 0 : i32
    %c0_i32_0 = arith.constant 0 : i32
    %c0_i32_1 = arith.constant 0 : i32
    return %c0_i32, %c0_i32_0 : i32, i32
  }
  func.func @transform_8(%arg0: i32) -> (i32, i32) {
    %c0_i32 = arith.constant 0 : i32
    %c0_i32_0 = arith.constant 0 : i32
    %c0_i32_1 = arith.constant 0 : i32
    return %c0_i32, %c0_i32_0 : i32, i32
  }
  func.func @transform_9(%arg0: i32) -> (i32, i32, i32) {
    %c0_i32 = arith.constant 0 : i32
    %c0_i32_0 = arith.constant 0 : i32
    %c0_i32_1 = arith.constant 0 : i32
    return %arg0, %c0_i32, %c0_i32_0 : i32, i32, i32
  }
}

</mosaic_0001>

<llo_original>
// kernel: tpu_custom_call.1
$region0: #{tpu_custom_call.1}
  #allocation0 [shape = 'u32[]', space=smem, size = 0x4, offset = 0x4, fixed_abs, tag = 'smem constant byte address 0x4 - core index']
  #allocation1 [shape = 'u32[72,128]{1,0:T(1,128)}', space=vmem, size = 0x9000, scoped, tag = 'internal scratch']
  %s0 = inlined_call_operand.vmem [shape: f32[2,32,128], index: 0, kind: input, shape index: {}]
  %s1 = inlined_call_operand.vmem [shape: f32[32,1], index: 1, kind: input, shape index: {}]
  %s2 = inlined_call_operand.vmem [shape: f32[32,1], index: 2, kind: input, shape index: {}]
  %s3 = inlined_call_operand.vmem [shape: f32[8,32], index: 3, kind: input, shape index: {}]
  %s4 = inlined_call_operand.vmem [shape: f32[32,8], index: 4, kind: input, shape index: {}]
  %s5 = inlined_call_operand.vmem [shape: bf16[96,32], index: 5, kind: input, shape index: {}]
  %s6 = inlined_call_operand.vmem [shape: f32[96,1], index: 6, kind: input, shape index: {}]
  %s7 = inlined_call_operand.vmem [shape: bf16[32,32], index: 7, kind: input, shape index: {}]
  %s8 = inlined_call_operand.vmem [shape: f32[32,1], index: 8, kind: input, shape index: {}]
  %s9 = inlined_call_operand.hbm [shape: f32[2,32,128], index: 9, kind: output, shape index: {}]
  %s10 = sld [smem:[#allocation0]]
  $region69: #{tpu_custom_call.1} parent=0
    _
  %s12 = ssub.s32 1, %s10
  %s13 = scalar_select 0, %s12, %s10
  $region1: #{tpu_custom_call.1} parent=0
    #allocation2 [shape = 'u8[32768]{0}', space=vmem, size = 0x8000, scoped, tag = 'output window, operand 0']
    #allocation3 [shape = 's32[2]{0}', space=sflag, size = 0x8, scoped, tag = 'scoped memory for tpu_custom_call.1']
    %14 = vsyncpa [#allocation3], 0
    %s15 = scalar_lea.sflag [#allocation3], 1
    %16 = vsyncpa %s15, 0
    loop: start=0, step=1, limit=4
    $region2: #{tpu_custom_call.1} parent=1 // loop_pre_header
      _
    $region3: #{tpu_custom_call.1} parent=1 // loop_header
      %s18 = sphi 0, %s22
      %p19 = scmp.ge.s32.totalorder %s18, 4
      %s28 = sphi 0, %s30
      %s31 = sphi 0, %s28
      %s32 = sphi 0, %s31
      %s48 = sphi 0, %s32
      %s52 = sphi 0, %s52
      %s54 = sphi 0, %s52
      %s55 = sphi 0, %s54
      %s69 = sphi 0, %s55
      %s73 = sphi 0, %s73
      %s75 = sphi 0, %s73
      %s76 = sphi 0, %s75
      %s90 = sphi 0, %s76
      %s94 = sphi 0, %s94
      %s96 = sphi 0, %s94
      %s97 = sphi 0, %s96
      %s111 = sphi 0, %s97
      %s115 = sphi 0, %s115
      %s117 = sphi 0, %s115
      %s118 = sphi 0, %s117
      %s132 = sphi 0, %s118
      %s136 = sphi 0, %s136
      %s138 = sphi 0, %s136
      %s139 = sphi 0, %s138
      %s153 = sphi 0, %s139
      %s157 = sphi 0, %s157
      %s159 = sphi 0, %s157
      %s160 = sphi 0, %s159
      %s174 = sphi 0, %s160
      %s178 = sphi 0, %s178
      %s180 = sphi 0, %s178
      %s181 = sphi 0, %s180
      %s195 = sphi 0, %s181
      %s199 = sphi 0, %s199
      %s201 = sphi 0, %s199
      %s202 = sphi 0, %s201
      %s216 = sphi 0, %s202
      %s222 = sphi 0, %s224
      %s225 = sphi 0, %s222
      %s226 = sphi 0, %s225
      %s242 = sphi 0, %s226
    $region4: #{tpu_custom_call.1} parent=1 // loop_header_branch
      %21 = sbr.rel (%p19) target = $region8
    $region5: #{tpu_custom_call.1} parent=1 // loop_body
      %s23 = ssub.s32 %s18, 1
      %s24 = ssub.s32 %s18, 2
      %s25 = sadd.s32 %s18, 1
      %s26 = ssub.s32 %s18, %s25
      %p27 = scmp.eq.s32.totalorder %s26, 0
      %s29 = sadd.s32 %s28, 1
      %s30 = scalar_select %p27, %s28, %s29
      %p33 = pneg %p27
      %p34 = scmp.eq.s32.totalorder %s18, 1
      %p35 = por %p33, %p34
      %p36 = scmp.ne.s32.totalorder %s28, %s31
      %p37 = scmp.eq.s32.totalorder %s18, 0
      %p38 = por %p36, %p37
      %p39 = scmp.ne.s32.totalorder %s28, %s31
      %p40 = scmp.eq.s32.totalorder %s23, 1
      %p41 = por %p39, %p40
      %p42 = scmp.ne.s32.totalorder %s31, %s32
      %p43 = scmp.eq.s32.totalorder %s23, 0
      %p44 = por %p42, %p43
      %p45 = scmp.ne.s32.totalorder %s31, %s32
      %p46 = scmp.eq.s32.totalorder %s24, 1
      %p47 = por %p45, %p46
      %p49 = scmp.ne.s32.totalorder %s32, %s48
      %p50 = scmp.eq.s32.totalorder %s24, 0
      %p51 = por %p49, %p50
      %s53 = sadd.s32 %s52, 1
      %p56 = scmp.eq.s32.totalorder %s18, 1
      %p57 = scmp.ne.s32.totalorder %s52, %s54
      %p58 = scmp.eq.s32.totalorder %s18, 0
      %p59 = por %p57, %p58
      %p60 = scmp.ne.s32.totalorder %s52, %s54
      %p61 = scmp.eq.s32.totalorder %s23, 1
      %p62 = por %p60, %p61
      %p63 = scmp.ne.s32.totalorder %s54, %s55
      %p64 = scmp.eq.s32.totalorder %s23, 0
      %p65 = por %p63, %p64
      %p66 = scmp.ne.s32.totalorder %s54, %s55
      %p67 = scmp.eq.s32.totalorder %s24, 1
      %p68 = por %p66, %p67
      %p70 = scmp.ne.s32.totalorder %s55, %s69
      %p71 = scmp.eq.s32.totalorder %s24, 0
      %p72 = por %p70, %p71
      %s74 = sadd.s32 %s73, 1
      %p77 = scmp.eq.s32.totalorder %s18, 1
      %p78 = scmp.ne.s32.totalorder %s73, %s75
      %p79 = scmp.eq.s32.totalorder %s18, 0
      %p80 = por %p78, %p79
      %p81 = scmp.ne.s32.totalorder %s73, %s75
      %p82 = scmp.eq.s32.totalorder %s23, 1
      %p83 = por %p81, %p82
      %p84 = scmp.ne.s32.totalorder %s75, %s76
      %p85 = scmp.eq.s32.totalorder %s23, 0
      %p86 = por %p84, %p85
      %p87 = scmp.ne.s32.totalorder %s75, %s76
      %p88 = scmp.eq.s32.totalorder %s24, 1
      %p89 = por %p87, %p88
      %p91 = scmp.ne.s32.totalorder %s76, %s90
      %p92 = scmp.eq.s32.totalorder %s24, 0
      %p93 = por %p91, %p92
      %s95 = sadd.s32 %s94, 1
      %p98 = scmp.eq.s32.totalorder %s18, 1
      %p99 = scmp.ne.s32.totalorder %s94, %s96
      %p100 = scmp.eq.s32.totalorder %s18, 0
      %p101 = por %p99, %p100
      %p102 = scmp.ne.s32.totalorder %s94, %s96
      %p103 = scmp.eq.s32.totalorder %s23, 1
      %p104 = por %p102, %p103
      %p105 = scmp.ne.s32.totalorder %s96, %s97
      %p106 = scmp.eq.s32.totalorder %s23, 0
      %p107 = por %p105, %p106
      %p108 = scmp.ne.s32.totalorder %s96, %s97
      %p109 = scmp.eq.s32.totalorder %s24, 1
      %p110 = por %p108, %p109
      %p112 = scmp.ne.s32.totalorder %s97, %s111
      %p113 = scmp.eq.s32.totalorder %s24, 0
      %p114 = por %p112, %p113
      %s116 = sadd.s32 %s115, 1
      %p119 = scmp.eq.s32.totalorder %s18, 1
      %p120 = scmp.ne.s32.totalorder %s115, %s117
      %p121 = scmp.eq.s32.totalorder %s18, 0
      %p122 = por %p120, %p121
      %p123 = scmp.ne.s32.totalorder %s115, %s117
      %p124 = scmp.eq.s32.totalorder %s23, 1
      %p125 = por %p123, %p124
      %p126 = scmp.ne.s32.totalorder %s117, %s118
      %p127 = scmp.eq.s32.totalorder %s23, 0
      %p128 = por %p126, %p127
      %p129 = scmp.ne.s32.totalorder %s117, %s118
      %p130 = scmp.eq.s32.totalorder %s24, 1
      %p131 = por %p129, %p130
      %p133 = scmp.ne.s32.totalorder %s118, %s132
      %p134 = scmp.eq.s32.totalorder %s24, 0
      %p135 = por %p133, %p134
      %s137 = sadd.s32 %s136, 1
      %p140 = scmp.eq.s32.totalorder %s18, 1
      %p141 = scmp.ne.s32.totalorder %s136, %s138
      %p142 = scmp.eq.s32.totalorder %s18, 0
      %p143 = por %p141, %p142
      %p144 = scmp.ne.s32.totalorder %s136, %s138
      %p145 = scmp.eq.s32.totalorder %s23, 1
      %p146 = por %p144, %p145
      %p147 = scmp.ne.s32.totalorder %s138, %s139
      %p148 = scmp.eq.s32.totalorder %s23, 0
      %p149 = por %p147, %p148
      %p150 = scmp.ne.s32.totalorder %s138, %s139
      %p151 = scmp.eq.s32.totalorder %s24, 1
      %p152 = por %p150, %p151
      %p154 = scmp.ne.s32.totalorder %s139, %s153
      %p155 = scmp.eq.s32.totalorder %s24, 0
      %p156 = por %p154, %p155
      %s158 = sadd.s32 %s157, 1
      %p161 = scmp.eq.s32.totalorder %s18, 1
      %p162 = scmp.ne.s32.totalorder %s157, %s159
      %p163 = scmp.eq.s32.totalorder %s18, 0
      %p164 = por %p162, %p163
      %p165 = scmp.ne.s32.totalorder %s157, %s159
      %p166 = scmp.eq.s32.totalorder %s23, 1
      %p167 = por %p165, %p166
      %p168 = scmp.ne.s32.totalorder %s159, %s160
      %p169 = scmp.eq.s32.totalorder %s23, 0
      %p170 = por %p168, %p169
      %p171 = scmp.ne.s32.totalorder %s159, %s160
      %p172 = scmp.eq.s32.totalorder %s24, 1
      %p173 = por %p171, %p172
      %p175 = scmp.ne.s32.totalorder %s160, %s174
      %p176 = scmp.eq.s32.totalorder %s24, 0
      %p177 = por %p175, %p176
      %s179 = sadd.s32 %s178, 1
      %p182 = scmp.eq.s32.totalorder %s18, 1
      %p183 = scmp.ne.s32.totalorder %s178, %s180
      %p184 = scmp.eq.s32.totalorder %s18, 0
      %p185 = por %p183, %p184
      %p186 = scmp.ne.s32.totalorder %s178, %s180
      %p187 = scmp.eq.s32.totalorder %s23, 1
      %p188 = por %p186, %p187
      %p189 = scmp.ne.s32.totalorder %s180, %s181
      %p190 = scmp.eq.s32.totalorder %s23, 0
      %p191 = por %p189, %p190
      %p192 = scmp.ne.s32.totalorder %s180, %s181
      %p193 = scmp.eq.s32.totalorder %s24, 1
      %p194 = por %p192, %p193
      %p196 = scmp.ne.s32.totalorder %s181, %s195
      %p197 = scmp.eq.s32.totalorder %s24, 0
      %p198 = por %p196, %p197
      %s200 = sadd.s32 %s199, 1
      %p203 = scmp.eq.s32.totalorder %s18, 1
      %p204 = scmp.ne.s32.totalorder %s199, %s201
      %p205 = scmp.eq.s32.totalorder %s18, 0
      %p206 = por %p204, %p205
      %p207 = scmp.ne.s32.totalorder %s199, %s201
      %p208 = scmp.eq.s32.totalorder %s23, 1
      %p209 = por %p207, %p208
      %p210 = scmp.ne.s32.totalorder %s201, %s202
      %p211 = scmp.eq.s32.totalorder %s23, 0
      %p212 = por %p210, %p211
      %p213 = scmp.ne.s32.totalorder %s201, %s202
      %p214 = scmp.eq.s32.totalorder %s24, 1
      %p215 = por %p213, %p214
      %p217 = scmp.ne.s32.totalorder %s202, %s216
      %p218 = scmp.eq.s32.totalorder %s24, 0
      %p219 = por %p217, %p218
      %s220 = ssub.s32 %s18, %s25
      %p221 = scmp.eq.s32.totalorder %s220, 0
      %s223 = sadd.s32 %s222, 1
      %s224 = scalar_select %p221, %s222, %s223
      %p227 = pneg %p221
      %p228 = scmp.eq.s32.totalorder %s18, 1
      %p229 = por %p227, %p228
      %p230 = scmp.ne.s32.totalorder %s222, %s225
      %p231 = scmp.eq.s32.totalorder %s18, 0
      %p232 = por %p230, %p231
      %p233 = scmp.ne.s32.totalorder %s222, %s225
      %p234 = scmp.eq.s32.totalorder %s23, 1
      %p235 = por %p233, %p234
      %p236 = scmp.ne.s32.totalorder %s225, %s226
      %p237 = scmp.eq.s32.totalorder %s23, 0
      %p238 = por %p236, %p237
      %p239 = scmp.ne.s32.totalorder %s225, %s226
      %p240 = scmp.eq.s32.totalorder %s24, 1
      %p241 = por %p239, %p240
      %p243 = scmp.ne.s32.totalorder %s226, %s242
      %p244 = scmp.eq.s32.totalorder %s24, 0
      %p245 = por %p243, %p244
      %p246 = scmp.le.s32.totalorder 1, %s18
      %p247 = scmp.lt.s32.totalorder %s18, 3
      %p248 = pnand %p246, %p247
      %p249 = pneg %p248
      // Predicated region
      $region9: #{tpu_custom_call.1} parent=5 // pred_check
        _
      $region10: #{tpu_custom_call.1} parent=5 // pred_check_branch
        %251 = sbr.rel (%p248) target = $region12
      $region11: #{tpu_custom_call.1} parent=5 // pred_region
        %s252 = ssub.s32 %s18, 1
        // Predicated region
        $region13: #{tpu_custom_call.1} parent=11 // pred_check
          %p253 = pneg %p65
        $region14: #{tpu_custom_call.1} parent=11 // pred_check_branch
          %255 = sbr.rel (%p253) target = $region16
        $region15: #{tpu_custom_call.1} parent=11 // pred_region
          _
        $region16: #{tpu_custom_call.1} parent=11 // pred_fallthru
          _
        // Predicated region
        $region17: #{tpu_custom_call.1} parent=11 // pred_check
          %p256 = pneg %p86
        $region18: #{tpu_custom_call.1} parent=11 // pred_check_branch
          %258 = sbr.rel (%p256) target = $region20
        $region19: #{tpu_custom_call.1} parent=11 // pred_region
          _
        $region20: #{tpu_custom_call.1} parent=11 // pred_fallthru
          _
        // Predicated region
        $region21: #{tpu_custom_call.1} parent=11 // pred_check
          %p259 = pneg %p107
        $region22: #{tpu_custom_call.1} parent=11 // pred_check_branch
          %261 = sbr.rel (%p259) target = $region24
        $region23: #{tpu_custom_call.1} parent=11 // pred_region
          _
        $region24: #{tpu_custom_call.1} parent=11 // pred_fallthru
          _
        // Predicated region
        $region25: #{tpu_custom_call.1} parent=11 // pred_check
          %p262 = pneg %p128
        $region26: #{tpu_custom_call.1} parent=11 // pred_check_branch
          %264 = sbr.rel (%p262) target = $region28
        $region27: #{tpu_custom_call.1} parent=11 // pred_region
          _
        $region28: #{tpu_custom_call.1} parent=11 // pred_fallthru
          _
        // Predicated region
        $region29: #{tpu_custom_call.1} parent=11 // pred_check
          %p265 = pneg %p149
        $region30: #{tpu_custom_call.1} parent=11 // pred_check_branch
          %267 = sbr.rel (%p265) target = $region32
        $region31: #{tpu_custom_call.1} parent=11 // pred_region
          _
        $region32: #{tpu_custom_call.1} parent=11 // pred_fallthru
          _
        // Predicated region
        $region33: #{tpu_custom_call.1} parent=11 // pred_check
          %p268 = pneg %p170
        $region34: #{tpu_custom_call.1} parent=11 // pred_check_branch
          %270 = sbr.rel (%p268) target = $region36
        $region35: #{tpu_custom_call.1} parent=11 // pred_region
          _
        $region36: #{tpu_custom_call.1} parent=11 // pred_fallthru
          _
        // Predicated region
        $region37: #{tpu_custom_call.1} parent=11 // pred_check
          %p271 = pneg %p191
        $region38: #{tpu_custom_call.1} parent=11 // pred_check_branch
          %273 = sbr.rel (%p271) target = $region40
        $region39: #{tpu_custom_call.1} parent=11 // pred_region
          _
        $region40: #{tpu_custom_call.1} parent=11 // pred_fallthru
          _
        // Predicated region
        $region41: #{tpu_custom_call.1} parent=11 // pred_check
          %p274 = pneg %p212
        $region42: #{tpu_custom_call.1} parent=11 // pred_check_branch
          %276 = sbr.rel (%p274) target = $region44
        $region43: #{tpu_custom_call.1} parent=11 // pred_region
          _
        $region44: #{tpu_custom_call.1} parent=11 // pred_fallthru
          _
      $region12: #{tpu_custom_call.1} parent=5 // pred_fallthru
        _
      %p277 = scmp.lt.s32.totalorder %s18, 2
      // Predicated region
      $region45: #{tpu_custom_call.1} parent=5 // pred_check
        %p278 = pneg %p277
      $region46: #{tpu_custom_call.1} parent=5 // pred_check_branch
        %280 = sbr.rel (%p278) target = $region48
      $region47: #{tpu_custom_call.1} parent=5 // pred_region
        // Predicated region
        $region49: #{tpu_custom_call.1} parent=47 // pred_check
          %p281 = pneg %p38
        $region50: #{tpu_custom_call.1} parent=47 // pred_check_branch
          %283 = sbr.rel (%p281) target = $region52
        $region51: #{tpu_custom_call.1} parent=47 // pred_region
          %p284 = scmp.lt.s32.totalorder %s18, 1
          %s285 = scalar_select %p284, %s18, 1
          %s286 = smul.addr %s285, 4
          %s287 = smul.addr %s286, 8
          %s288 = scalar_lea.vmem %s0, %s287
        $region52: #{tpu_custom_call.1} parent=47 // pred_fallthru
          _
      $region48: #{tpu_custom_call.1} parent=5 // pred_fallthru
        _
      %p289 = scmp.le.s32.totalorder 1, %s18
      %p290 = scmp.lt.s32.totalorder %s18, 3
      %p291 = pnand %p289, %p290
      %p292 = pneg %p291
      // Predicated region
      $region53: #{tpu_custom_call.1} parent=5 // pred_check
        _
      $region54: #{tpu_custom_call.1} parent=5 // pred_check_branch
        %294 = sbr.rel (%p291) target = $region56
      $region55: #{tpu_custom_call.1} parent=5 // pred_region
        %s295 = ssub.s32 %s18, 1
        %p296 = scmp.lt.s32.totalorder %s23, 1
        %s297 = scalar_select %p296, %s23, 1
        %s298 = smul.addr %s297, 4
        %s299 = smul.addr %s298, 8
        %s300 = scalar_lea.vmem %s0, %s299
        %p301 = pneg %p44
        %p302 = pneg %p41
        %p303 = pneg %p65
        %p304 = pneg %p62
        %p305 = pneg %p86
        %p306 = pneg %p83
        %p307 = pneg %p107
        %p308 = pneg %p104
        %p309 = pneg %p128
        %p310 = pneg %p125
        %p311 = pneg %p149
        %p312 = pneg %p146
        %p313 = pneg %p170
        %p314 = pneg %p167
        %p315 = pneg %p191
        %p316 = pneg %p188
        %p317 = pneg %p212
        %p318 = pneg %p209
        %p319 = pneg %p238
        %p320 = pneg %p235
        %s321 = sand.u32 %s225, 1
        %s322 = scalar_lea.sflag [#allocation3], %s321
        %s323 = sand.u32 %s225, 1
        %s324 = smul.addr %s323, 32
        %s325 = scalar_lea.vmem [#allocation2], %s324
        %p326 = scmp.lt.s32.totalorder %s23, 1
        %s327 = scalar_select %p326, %s23, 1
        %s328 = smul.addr %s327, 4
        %s329 = smul.addr %s328, 8
        %s330 = scalar_lea.vmem %s0, %s329
        %v332 = vld [vmem:[%s330] sm:$0xff]
        %v333 = vld [vmem:[%s330 + $0x8] sm:$0xff]
        %v334 = vld [vmem:[%s330 + $0x10] sm:$0xff]
        %v335 = vld [vmem:[%s330 + $0x18] sm:$0xff]
        %336 = vadd.xlane.f32.xlu0 %v332
        %v337 = vpop.xlane.xlu0 %336
        %338 = vadd.xlane.f32.xlu0 %v333
        %v339 = vpop.xlane.xlu0 %338
        %340 = vadd.xlane.f32.xlu0 %v334
        %v341 = vpop.xlane.xlu0 %340
        %342 = vadd.xlane.f32.xlu0 %v335
        %v343 = vpop.xlane.xlu0 %342
        %v344 = vmul.f32 %v332, %v332
        %v345 = vmul.f32 %v333, %v333
        %v346 = vmul.f32 %v334, %v334
        %v347 = vmul.f32 %v335, %v335
        %348 = vadd.xlane.f32.xlu0 %v344
        %v349 = vpop.xlane.xlu0 %348
        %350 = vadd.xlane.f32.xlu0 %v345
        %v351 = vpop.xlane.xlu0 %350
        %352 = vadd.xlane.f32.xlu0 %v346
        %v353 = vpop.xlane.xlu0 %352
        %354 = vadd.xlane.f32.xlu0 %v347
        %v355 = vpop.xlane.xlu0 %354
        %v356 = vld [vmem:[%s3] sm:$0xff]
        %vm357 = vcmask 261120
        %v359 = vsel %vm357, %v356, 0
        %361 = vmatpush.msra.mxu0 0.0
        %362 = vmatpush.msra.mxu0 0.0
        %363 = vmatpush.msra.mxu0 0.0
        %364 = vmatpush.msra.mxu0 0.0
        %365 = vmatpush.msra.mxu0 0.0
        %366 = vmatpush.msra.mxu0 0.0
        %367 = vmatpush.msra.mxu0 0.0
        %368 = vmatpush.msra.mxu0 0.0
        %369 = vmatpush.msra.mxu0 0.0
        %370 = vmatpush.msra.mxu0 0.0
        %371 = vmatpush.msra.mxu0 0.0
        %372 = vmatpush.msra.mxu0 0.0
        %373 = vmatpush.msra.mxu0 %v343
        %374 = vmatpush.msra.mxu0 %v341
        %375 = vmatpush.msra.mxu0 %v339
        %376 = vmatpush.msra.mxu0 %v337
        %377 = vmatmul.f32.gmra.mxu0 %v359
        %v378 = vpop.f32.mrf.mxu0
        %v379 = vadd.f32 0.0, %v378
        %380 = vdwg.mxu0
        %381 = vmatpush.msra.mxu0 0.0
        %382 = vmatpush.msra.mxu0 0.0
        %383 = vmatpush.msra.mxu0 0.0
        %384 = vmatpush.msra.mxu0 0.0
        %385 = vmatpush.msra.mxu0 0.0
        %386 = vmatpush.msra.mxu0 0.0
        %387 = vmatpush.msra.mxu0 0.0
        %388 = vmatpush.msra.mxu0 0.0
        %389 = vmatpush.msra.mxu0 0.0
        %390 = vmatpush.msra.mxu0 0.0
        %391 = vmatpush.msra.mxu0 0.0
        %392 = vmatpush.msra.mxu0 0.0
        %393 = vmatpush.msra.mxu0 %v355
        %394 = vmatpush.msra.mxu0 %v353
        %395 = vmatpush.msra.mxu0 %v351
        %396 = vmatpush.msra.mxu0 %v349
        %397 = vmatmul.f32.gmra.mxu0 %v359
        %v398 = vpop.f32.mrf.mxu0
        %v399 = vadd.f32 0.0, %v398
        %400 = vdwg.mxu0
        %v401 = vmul.f32 %v379, 0.001953125
        %v402 = vmul.f32 %v399, 0.001953125
        %v403 = vmul.f32 %v401, %v401
        %v404 = vsub.f32 %v402, %v403
        %v405 = vmax.f32 %v404, 0.0
        %v406 = vadd.f32 %v405, 1e-05
        %v407 = vrsqrt.pop %v406
        %v408 = vmul.f32 %v407, %v406
        %v409 = vmul.f32 %v408, %v407
        %v410 = vmul.f32 0.5, %v409
        %v411 = vsub.f32 1.5, %v410
        %v412 = vmul.f32 %v407, %v411
        %vm413 = vweird.f32 %v406
        %vm414 = vweird.f32 %v407
        %vm415 = vmor %vm413, %vm414
        %v416 = vsel %vm415, %v407, %v412
        %v417 = vld [vmem:[%s4] sm:$0xff]
        %v418 = vld [vmem:[%s4 + $0x8] sm:$0xff]
        %v419 = vld [vmem:[%s4 + $0x10] sm:$0xff]
        %v420 = vld [vmem:[%s4 + $0x18] sm:$0xff]
        %vm421 = vcmask 64512
        %v423 = vsel %vm421, %v417, 0
        %v426 = vsel %vm421, %v418, 0
        %v429 = vsel %vm421, %v419, 0
        %v432 = vsel %vm421, %v420, 0
        %434 = vmatpush.msra.mxu0 0.0
        %435 = vmatpush.msra.mxu0 0.0
        %436 = vmatpush.msra.mxu0 0.0
        %437 = vmatpush.msra.mxu0 0.0
        %438 = vmatpush.msra.mxu0 0.0
        %439 = vmatpush.msra.mxu0 0.0
        %440 = vmatpush.msra.mxu0 0.0
        %441 = vmatpush.msra.mxu0 0.0
        %442 = vmatpush.msra.mxu0 0.0
        %443 = vmatpush.msra.mxu0 0.0
        %444 = vmatpush.msra.mxu0 0.0
        %445 = vmatpush.msra.mxu0 0.0
        %446 = vmatpush.msra.mxu0 0.0
        %447 = vmatpush.msra.mxu0 0.0
        %448 = vmatpush.msra.mxu0 0.0
        %449 = vmatpush.msra.mxu0 %v401
        %450 = vmatmul.f32.gmra.mxu0 %v423
        %v451 = vpop.f32.mrf.mxu0
        %v452 = vadd.f32 0.0, %v451
        %453 = vmatmul.f32.gmra.mxu0 %v426
        %v454 = vpop.f32.mrf.mxu0
        %v455 = vadd.f32 0.0, %v454
        %456 = vmatmul.f32.gmra.mxu0 %v429
        %v457 = vpop.f32.mrf.mxu0
        %v458 = vadd.f32 0.0, %v457
        %459 = vmatmul.f32.gmra.mxu0 %v432
        %v460 = vpop.f32.mrf.mxu0
        %v461 = vadd.f32 0.0, %v460
        %462 = vdwg.mxu0
        %463 = vmatpush.msra.mxu0 0.0
        %464 = vmatpush.msra.mxu0 0.0
        %465 = vmatpush.msra.mxu0 0.0
        %466 = vmatpush.msra.mxu0 0.0
        %467 = vmatpush.msra.mxu0 0.0
        %468 = vmatpush.msra.mxu0 0.0
        %469 = vmatpush.msra.mxu0 0.0
        %470 = vmatpush.msra.mxu0 0.0
        %471 = vmatpush.msra.mxu0 0.0
        %472 = vmatpush.msra.mxu0 0.0
        %473 = vmatpush.msra.mxu0 0.0
        %474 = vmatpush.msra.mxu0 0.0
        %475 = vmatpush.msra.mxu0 0.0
        %476 = vmatpush.msra.mxu0 0.0
        %477 = vmatpush.msra.mxu0 0.0
        %478 = vmatpush.msra.mxu0 %v416
        %479 = vmatmul.f32.gmra.mxu0 %v423
        %v480 = vpop.f32.mrf.mxu0
        %v481 = vadd.f32 0.0, %v480
        %482 = vmatmul.f32.gmra.mxu0 %v426
        %v483 = vpop.f32.mrf.mxu0
        %v484 = vadd.f32 0.0, %v483
        %485 = vmatmul.f32.gmra.mxu0 %v429
        %v486 = vpop.f32.mrf.mxu0
        %v487 = vadd.f32 0.0, %v486
        %488 = vmatmul.f32.gmra.mxu0 %v432
        %v489 = vpop.f32.mrf.mxu0
        %v490 = vadd.f32 0.0, %v489
        %491 = vdwg.mxu0
        %v492 = vld [vmem:[%s1] sm:$0xff]
        %v493 = vld [vmem:[%s1 + $0x8] sm:$0xff]
        %v494 = vld [vmem:[%s1 + $0x10] sm:$0xff]
        %v495 = vld [vmem:[%s1 + $0x18] sm:$0xff]
        %v496 = vmul.f32 %v481, %v492
        %v497 = vmul.f32 %v484, %v493
        %v498 = vmul.f32 %v487, %v494
        %v499 = vmul.f32 %v490, %v495
        %v500 = vld [vmem:[%s2] sm:$0xff]
        %v501 = vld [vmem:[%s2 + $0x8] sm:$0xff]
        %v502 = vld [vmem:[%s2 + $0x10] sm:$0xff]
        %v503 = vld [vmem:[%s2 + $0x18] sm:$0xff]
        %v504 = vmul.f32 %v452, %v496
        %v505 = vmul.f32 %v455, %v497
        %v506 = vmul.f32 %v458, %v498
        %v507 = vmul.f32 %v461, %v499
        %v508 = vsub.f32 %v500, %v504
        %v509 = vsub.f32 %v501, %v505
        %v510 = vsub.f32 %v502, %v506
        %v511 = vsub.f32 %v503, %v507
        %513 = vset.pattern.permute.xlu0 0
        %514 = vperm.xlu0 %513, %v496
        %v515 = vpop.permute.xlu0 %514
        %518 = vset.pattern.permute.xlu0 0
        %519 = vperm.xlu0 %518, %v497
        %v520 = vpop.permute.xlu0 %519
        %523 = vset.pattern.permute.xlu0 0
        %524 = vperm.xlu0 %523, %v498
        %v525 = vpop.permute.xlu0 %524
        %528 = vset.pattern.permute.xlu0 0
        %529 = vperm.xlu0 %528, %v499
        %v530 = vpop.permute.xlu0 %529
        %v532 = vmul.f32 %v332, %v515
        %v533 = vmul.f32 %v333, %v520
        %v534 = vmul.f32 %v334, %v525
        %v535 = vmul.f32 %v335, %v530
        %537 = vset.pattern.permute.xlu0 0
        %538 = vperm.xlu0 %537, %v508
        %v539 = vpop.permute.xlu0 %538
        %542 = vset.pattern.permute.xlu0 0
        %543 = vperm.xlu0 %542, %v509
        %v544 = vpop.permute.xlu0 %543
        %547 = vset.pattern.permute.xlu0 0
        %548 = vperm.xlu0 %547, %v510
        %v549 = vpop.permute.xlu0 %548
        %552 = vset.pattern.permute.xlu0 0
        %553 = vperm.xlu0 %552, %v511
        %v554 = vpop.permute.xlu0 %553
        %v556 = vadd.f32 %v532, %v539
        %v557 = vadd.f32 %v533, %v544
        %v558 = vadd.f32 %v534, %v549
        %v559 = vadd.f32 %v535, %v554
        %v560 = vld [vmem:[%s5] sm:$0xf]
        %v561 = vld [vmem:[%s5 + $0x4] sm:$0xf]
        %v562 = vld [vmem:[%s5 + $0x8] sm:$0xf]
        %v563 = vld [vmem:[%s5 + $0xc] sm:$0xf]
        %v564 = vld [vmem:[%s5 + $0x10] sm:$0xf]
        %v565 = vld [vmem:[%s5 + $0x14] sm:$0xf]
        %v566 = vld [vmem:[%s5 + $0x18] sm:$0xf]
        %v567 = vld [vmem:[%s5 + $0x1c] sm:$0xf]
        %v568 = vld [vmem:[%s5 + $0x20] sm:$0xf]
        %v569 = vld [vmem:[%s5 + $0x24] sm:$0xf]
        %v570 = vld [vmem:[%s5 + $0x28] sm:$0xf]
        %v571 = vld [vmem:[%s5 + $0x2c] sm:$0xf]
        %v572 = vpack.c.bf16 %v557, %v556
        %v573 = vpack.c.bf16 %v559, %v558
        %v574 = vld [vmem:[%s6] sm:$0xff]
        %v575 = vld [vmem:[%s6 + $0x8] sm:$0xff]
        %v576 = vld [vmem:[%s6 + $0x10] sm:$0xff]
        %v577 = vld [vmem:[%s6 + $0x18] sm:$0xff]
        %v578 = vld [vmem:[%s6 + $0x20] sm:$0xff]
        %v579 = vld [vmem:[%s6 + $0x28] sm:$0xff]
        %v580 = vld [vmem:[%s6 + $0x30] sm:$0xff]
        %v581 = vld [vmem:[%s6 + $0x38] sm:$0xff]
        %v582 = vld [vmem:[%s6 + $0x40] sm:$0xff]
        %v583 = vld [vmem:[%s6 + $0x48] sm:$0xff]
        %v584 = vld [vmem:[%s6 + $0x50] sm:$0xff]
        %v585 = vld [vmem:[%s6 + $0x58] sm:$0xff]
        %587 = vset.pattern.permute.xlu0 0
        %588 = vperm.xlu0 %587, %v574
        %v589 = vpop.permute.xlu0 %588
        %592 = vset.pattern.permute.xlu0 0
        %593 = vperm.xlu0 %592, %v575
        %v594 = vpop.permute.xlu0 %593
        %597 = vset.pattern.permute.xlu0 0
        %598 = vperm.xlu0 %597, %v576
        %v599 = vpop.permute.xlu0 %598
        %602 = vset.pattern.permute.xlu0 0
        %603 = vperm.xlu0 %602, %v577
        %v604 = vpop.permute.xlu0 %603
        %607 = vset.pattern.permute.xlu0 0
        %608 = vperm.xlu0 %607, %v578
        %v609 = vpop.permute.xlu0 %608
        %612 = vset.pattern.permute.xlu0 0
        %613 = vperm.xlu0 %612, %v579
        %v614 = vpop.permute.xlu0 %613
        %617 = vset.pattern.permute.xlu0 0
        %618 = vperm.xlu0 %617, %v580
        %v619 = vpop.permute.xlu0 %618
        %622 = vset.pattern.permute.xlu0 0
        %623 = vperm.xlu0 %622, %v581
        %v624 = vpop.permute.xlu0 %623
        %627 = vset.pattern.permute.xlu0 0
        %628 = vperm.xlu0 %627, %v582
        %v629 = vpop.permute.xlu0 %628
        %632 = vset.pattern.permute.xlu0 0
        %633 = vperm.xlu0 %632, %v583
        %v634 = vpop.permute.xlu0 %633
        %637 = vset.pattern.permute.xlu0 0
        %638 = vperm.xlu0 %637, %v584
        %v639 = vpop.permute.xlu0 %638
        %642 = vset.pattern.permute.xlu0 0
        %643 = vperm.xlu0 %642, %v585
        %v644 = vpop.permute.xlu0 %643
        %v658 = vunpack.c.l.b16 %v560
        %v659 = vunpack.c.l.b16 %v561
        %v660 = vunpack.c.l.b16 %v562
        %v661 = vunpack.c.l.b16 %v563
        %v662 = vunpack.c.l.b16 %v564
        %v663 = vunpack.c.l.b16 %v565
        %v664 = vunpack.c.l.b16 %v566
        %v665 = vunpack.c.l.b16 %v567
        %v666 = vunpack.c.l.b16 %v568
        %v667 = vunpack.c.l.b16 %v569
        %v668 = vunpack.c.l.b16 %v570
        %v669 = vunpack.c.l.b16 %v571
        %v670 = vpack.c.b16 %v659, %v658
        %v671 = vpack.c.b16 %v661, %v660
        %v672 = vpack.c.b16 %v663, %v662
        %v673 = vpack.c.b16 %v665, %v664
        %v674 = vpack.c.b16 %v667, %v666
        %v675 = vpack.c.b16 %v669, %v668
        %v677 = vsel %vm357, %v670, 0
        %v680 = vsel %vm357, %v671, 0
        %v683 = vsel %vm357, %v672, 0
        %v686 = vsel %vm357, %v673, 0
        %v689 = vsel %vm357, %v674, 0
        %v692 = vsel %vm357, %v675, 0
        %694 = vmatpush.bf16.msra.mxu0 0
        %695 = vmatpush.bf16.msra.mxu0 0
        %696 = vmatpush.bf16.msra.mxu0 0
        %697 = vmatpush.bf16.msra.mxu0 0
        %698 = vmatpush.bf16.msra.mxu0 0
        %699 = vmatpush.bf16.msra.mxu0 0
        %700 = vmatpush.bf16.msra.mxu0 %v573
        %701 = vmatpush.bf16.msra.mxu0 %v572
        %702 = vmatmul.bf16.gmra.mxu0 %v677
        %v703 = vpop.f32.mrf.mxu0
        %v704 = vadd.f32 %v589, %v703
        %v705 = vpop.f32.mrf.mxu0
        %v706 = vadd.f32 %v594, %v705
        %707 = vmatmul.bf16.gmra.mxu0 %v680
        %v708 = vpop.f32.mrf.mxu0
        %v709 = vadd.f32 %v599, %v708
        %v710 = vpop.f32.mrf.mxu0
        %v711 = vadd.f32 %v604, %v710
        %712 = vmatmul.bf16.gmra.mxu0 %v683
        %v713 = vpop.f32.mrf.mxu0
        %v714 = vadd.f32 %v609, %v713
        %v715 = vpop.f32.mrf.mxu0
        %v716 = vadd.f32 %v614, %v715
        %717 = vmatmul.bf16.gmra.mxu0 %v686
        %v718 = vpop.f32.mrf.mxu0
        %v719 = vadd.f32 %v619, %v718
        %v720 = vpop.f32.mrf.mxu0
        %v721 = vadd.f32 %v624, %v720
        %722 = vmatmul.bf16.gmra.mxu0 %v689
        %v723 = vpop.f32.mrf.mxu0
        %v724 = vadd.f32 %v629, %v723
        %v725 = vpop.f32.mrf.mxu0
        %v726 = vadd.f32 %v634, %v725
        %727 = vmatmul.bf16.gmra.mxu0 %v692
        %v728 = vpop.f32.mrf.mxu0
        %v729 = vadd.f32 %v639, %v728
        %v730 = vpop.f32.mrf.mxu0
        %v731 = vadd.f32 %v644, %v730
        %732 = vdwg.mxu0
        %v733 = vmul.f32 %v704, 0.17677669
        %v734 = vmul.f32 %v706, 0.17677669
        %v735 = vmul.f32 %v709, 0.17677669
        %v736 = vmul.f32 %v711, 0.17677669
        %v737 = vpack.c.bf16 %v734, %v733
        %v738 = vpack.c.bf16 %v736, %v735
        %739 = vxpose.xlu0.b32.start [1/16] %v714, 128
        %740 = vxpose.xlu0.b32.cont [2/16] %v716, 128
        %741 = vxpose.xlu0.b32.cont [3/16] %v719, 128
        %742 = vxpose.xlu0.b32.cont [4/16] %v721, 128
        %743 = vxpose.xlu0.b32.cont [5/16] 0.0, 128
        %744 = vxpose.xlu0.b32.cont [6/16] 0.0, 128
        %745 = vxpose.xlu0.b32.cont [7/16] 0.0, 128
        %746 = vxpose.xlu0.b32.cont [8/16] 0.0, 128
        %747 = vxpose.xlu0.b32.cont [9/16] 0.0, 128
        %748 = vxpose.xlu0.b32.cont [10/16] 0.0, 128
        %749 = vxpose.xlu0.b32.cont [11/16] 0.0, 128
        %750 = vxpose.xlu0.b32.cont [12/16] 0.0, 128
        %751 = vxpose.xlu0.b32.cont [13/16] 0.0, 128
        %752 = vxpose.xlu0.b32.cont [14/16] 0.0, 128
        %753 = vxpose.xlu0.b32.cont [15/16] 0.0, 128
        %754 = vxpose.xlu0.b32.end [16/16] 0.0, 128
        %v755 = vpop.trf.xlu0
        %v756 = vpop.trf.xlu0
        %v757 = vpop.trf.xlu0
        %v758 = vpop.trf.xlu0
        %v759 = vpop.trf.xlu0
        %v760 = vpop.trf.xlu0
        %v761 = vpop.trf.xlu0
        %v762 = vpop.trf.xlu0
        %v763 = vpop.trf.xlu0
        %v764 = vpop.trf.xlu0
        %v765 = vpop.trf.xlu0
        %v766 = vpop.trf.xlu0
        %v767 = vpop.trf.xlu0
        %v768 = vpop.trf.xlu0
        %v769 = vpop.trf.xlu0
        %v770 = vpop.trf.xlu0
        %v771 = vpack.c.bf16 %v756, %v755
        %v772 = vpack.c.bf16 %v758, %v757
        %v773 = vpack.c.bf16 %v760, %v759
        %v774 = vpack.c.bf16 %v762, %v761
        %v775 = vpack.c.bf16 %v764, %v763
        %v776 = vpack.c.bf16 %v766, %v765
        %v777 = vpack.c.bf16 %v768, %v767
        %v778 = vpack.c.bf16 %v770, %v769
        %v779 = vpack.c.bf16 %v726, %v724
        %v780 = vpack.c.bf16 %v731, %v729
        %v782 = vsel %vm357, %v771, 0
        %v785 = vsel %vm357, %v772, 0
        %v788 = vsel %vm357, %v773, 0
        %v791 = vsel %vm357, %v774, 0
        %v794 = vsel %vm357, %v775, 0
        %v797 = vsel %vm357, %v776, 0
        %v800 = vsel %vm357, %v777, 0
        %v803 = vsel %vm357, %v778, 0
        %805 = vmatpush.bf16.msra.mxu0 0
        %806 = vmatpush.bf16.msra.mxu0 0
        %807 = vmatpush.bf16.msra.mxu0 0
        %808 = vmatpush.bf16.msra.mxu0 0
        %809 = vmatpush.bf16.msra.mxu0 0
        %810 = vmatpush.bf16.msra.mxu0 0
        %811 = vmatpush.bf16.msra.mxu0 %v738
        %812 = vmatpush.bf16.msra.mxu0 %v737
        %813 = vmatmul.bf16.gmra.mxu0 %v782
        %v814 = vpop.f32.mrf.mxu0
        %v815 = vadd.f32 0.0, %v814
        %v816 = vpop.f32.mrf.mxu0
        %v817 = vadd.f32 0.0, %v816
        %818 = vmatmul.bf16.gmra.mxu0 %v785
        %v819 = vpop.f32.mrf.mxu0
        %v820 = vadd.f32 0.0, %v819
        %v821 = vpop.f32.mrf.mxu0
        %v822 = vadd.f32 0.0, %v821
        %823 = vmatmul.bf16.gmra.mxu0 %v788
        %v824 = vpop.f32.mrf.mxu0
        %v825 = vadd.f32 0.0, %v824
        %v826 = vpop.f32.mrf.mxu0
        %v827 = vadd.f32 0.0, %v826
        %828 = vmatmul.bf16.gmra.mxu0 %v791
        %v829 = vpop.f32.mrf.mxu0
        %v830 = vadd.f32 0.0, %v829
        %v831 = vpop.f32.mrf.mxu0
        %v832 = vadd.f32 0.0, %v831
        %833 = vmatmul.bf16.gmra.mxu0 %v794
        %v834 = vpop.f32.mrf.mxu0
        %v835 = vadd.f32 0.0, %v834
        %v836 = vpop.f32.mrf.mxu0
        %v837 = vadd.f32 0.0, %v836
        %838 = vmatmul.bf16.gmra.mxu0 %v797
        %v839 = vpop.f32.mrf.mxu0
        %v840 = vadd.f32 0.0, %v839
        %v841 = vpop.f32.mrf.mxu0
        %v842 = vadd.f32 0.0, %v841
        %843 = vmatmul.bf16.gmra.mxu0 %v800
        %v844 = vpop.f32.mrf.mxu0
        %v845 = vadd.f32 0.0, %v844
        %v846 = vpop.f32.mrf.mxu0
        %v847 = vadd.f32 0.0, %v846
        %848 = vmatmul.bf16.gmra.mxu0 %v803
        %v849 = vpop.f32.mrf.mxu0
        %v850 = vadd.f32 0.0, %v849
        %v851 = vpop.f32.mrf.mxu0
        %v852 = vadd.f32 0.0, %v851
        %853 = vdwg.mxu0
        %v854 = vmax.f32 %v815, %v825
        %v855 = vmax.f32 %v817, %v827
        %v856 = vmax.f32 %v820, %v830
        %v857 = vmax.f32 %v822, %v832
        %v858 = vmax.f32 %v854, %v835
        %v859 = vmax.f32 %v855, %v837
        %v860 = vmax.f32 %v856, %v840
        %v861 = vmax.f32 %v857, %v842
        %v862 = vmax.f32 %v858, %v845
        %v863 = vmax.f32 %v859, %v847
        %v864 = vmax.f32 %v860, %v850
        %v865 = vmax.f32 %v861, %v852
        %v866 = vmax.f32 %v862, %v863
        %v867 = vmax.f32 %v864, %v865
        %v868 = vmax.f32 %v866, %v867
        %v869 = vrot.slane %v868, 4
        %v870 = vmax.f32 %v868, %v869
        %v871 = vrot.slane %v870, 2
        %v872 = vmax.f32 %v870, %v871
        %v873 = vrot.slane %v872, 1
        %v874 = vmax.f32 %v872, %v873
        %v875 = vsub.f32 %v815, %v874
        %v876 = vsub.f32 %v817, %v874
        %v877 = vsub.f32 %v820, %v874
        %v878 = vsub.f32 %v822, %v874
        %v879 = vsub.f32 %v825, %v874
        %v880 = vsub.f32 %v827, %v874
        %v881 = vsub.f32 %v830, %v874
        %v882 = vsub.f32 %v832, %v874
        %v883 = vsub.f32 %v835, %v874
        %v884 = vsub.f32 %v837, %v874
        %v885 = vsub.f32 %v840, %v874
        %v886 = vsub.f32 %v842, %v874
        %v887 = vsub.f32 %v845, %v874
        %v888 = vsub.f32 %v847, %v874
        %v889 = vsub.f32 %v850, %v874
        %v890 = vsub.f32 %v852, %v874
        %v891 = vmul.f32 %v875, 1.442695
        %v892 = vpow.pop %v891
        %v893 = vmul.f32 %v876, 1.442695
        %v894 = vpow.pop %v893
        %v895 = vmul.f32 %v877, 1.442695
        %v896 = vpow.pop %v895
        %v897 = vmul.f32 %v878, 1.442695
        %v898 = vpow.pop %v897
        %v899 = vmul.f32 %v879, 1.442695
        %v900 = vpow.pop %v899
        %v901 = vmul.f32 %v880, 1.442695
        %v902 = vpow.pop %v901
        %v903 = vmul.f32 %v881, 1.442695
        %v904 = vpow.pop %v903
        %v905 = vmul.f32 %v882, 1.442695
        %v906 = vpow.pop %v905
        %v907 = vmul.f32 %v883, 1.442695
        %v908 = vpow.pop %v907
        %v909 = vmul.f32 %v884, 1.442695
        %v910 = vpow.pop %v909
        %v911 = vmul.f32 %v885, 1.442695
        %v912 = vpow.pop %v911
        %v913 = vmul.f32 %v886, 1.442695
        %v914 = vpow.pop %v913
        %v915 = vmul.f32 %v887, 1.442695
        %v916 = vpow.pop %v915
        %v917 = vmul.f32 %v888, 1.442695
        %v918 = vpow.pop %v917
        %v919 = vmul.f32 %v889, 1.442695
        %v920 = vpow.pop %v919
        %v921 = vmul.f32 %v890, 1.442695
        %v922 = vpow.pop %v921
        %v923 = vadd.f32 %v892, %v894
        %v924 = vadd.f32 %v923, %v896
        %v925 = vadd.f32 %v924, %v898
        %v926 = vadd.f32 %v925, %v900
        %v927 = vadd.f32 %v926, %v902
        %v928 = vadd.f32 %v927, %v904
        %v929 = vadd.f32 %v928, %v906
        %v930 = vadd.f32 %v929, %v908
        %v931 = vadd.f32 %v930, %v910
        %v932 = vadd.f32 %v931, %v912
        %v933 = vadd.f32 %v932, %v914
        %v934 = vadd.f32 %v933, %v916
        %v935 = vadd.f32 %v934, %v918
        %v936 = vadd.f32 %v935, %v920
        %v937 = vadd.f32 %v936, %v922
        %v938 = vrot.slane %v937, 4
        %v939 = vadd.f32 %v937, %v938
        %v940 = vrot.slane %v939, 2
        %v941 = vadd.f32 %v939, %v940
        %v942 = vrot.slane %v941, 1
        %v943 = vadd.f32 %v941, %v942
        %v944 = vpack.c.bf16 %v894, %v892
        %v945 = vpack.c.bf16 %v898, %v896
        %v946 = vpack.c.bf16 %v902, %v900
        %v947 = vpack.c.bf16 %v906, %v904
        %v948 = vpack.c.bf16 %v910, %v908
        %v949 = vpack.c.bf16 %v914, %v912
        %v950 = vpack.c.bf16 %v918, %v916
        %v951 = vpack.c.bf16 %v922, %v920
        %952 = vmatpush.bf16.msra.mxu0 %v951
        %953 = vmatpush.bf16.msra.mxu0 %v950
        %954 = vmatpush.bf16.msra.mxu0 %v949
        %955 = vmatpush.bf16.msra.mxu0 %v948
        %956 = vmatpush.bf16.msra.mxu0 %v947
        %957 = vmatpush.bf16.msra.mxu0 %v946
        %958 = vmatpush.bf16.msra.mxu0 %v945
        %959 = vmatpush.bf16.msra.mxu0 %v944
        %960 = vmatmul.bf16.gmra.mxu0 %v779
        %v961 = vpop.f32.mrf.mxu0
        %v962 = vadd.f32 0.0, %v961
        %v963 = vpop.f32.mrf.mxu0
        %v964 = vadd.f32 0.0, %v963
        %965 = vmatmul.bf16.gmra.mxu0 %v780
        %v966 = vpop.f32.mrf.mxu0
        %v967 = vadd.f32 0.0, %v966
        %v968 = vpop.f32.mrf.mxu0
        %v969 = vadd.f32 0.0, %v968
        %970 = vdwg.mxu0
        %v971 = vrcp.pop %v943
        %v972 = vmul.f32 %v962, %v971
        %v973 = vmul.f32 %v964, %v971
        %v974 = vmul.f32 %v967, %v971
        %v975 = vmul.f32 %v969, %v971
        %v976 = vld [vmem:[%s7] sm:$0xf]
        %v977 = vld [vmem:[%s7 + $0x4] sm:$0xf]
        %v978 = vld [vmem:[%s7 + $0x8] sm:$0xf]
        %v979 = vld [vmem:[%s7 + $0xc] sm:$0xf]
        %v980 = vpack.c.bf16 %v973, %v972
        %v981 = vpack.c.bf16 %v975, %v974
        %v982 = vld [vmem:[%s8] sm:$0xff]
        %v983 = vld [vmem:[%s8 + $0x8] sm:$0xff]
        %v984 = vld [vmem:[%s8 + $0x10] sm:$0xff]
        %v985 = vld [vmem:[%s8 + $0x18] sm:$0xff]
        %987 = vset.pattern.permute.xlu0 0
        %988 = vperm.xlu0 %987, %v982
        %v989 = vpop.permute.xlu0 %988
        %992 = vset.pattern.permute.xlu0 0
        %993 = vperm.xlu0 %992, %v983
        %v994 = vpop.permute.xlu0 %993
        %997 = vset.pattern.permute.xlu0 0
        %998 = vperm.xlu0 %997, %v984
        %v999 = vpop.permute.xlu0 %998
        %1002 = vset.pattern.permute.xlu0 0
        %1003 = vperm.xlu0 %1002, %v985
        %v1004 = vpop.permute.xlu0 %1003
        %v1010 = vunpack.c.l.b16 %v976
        %v1011 = vunpack.c.l.b16 %v977
        %v1012 = vunpack.c.l.b16 %v978
        %v1013 = vunpack.c.l.b16 %v979
        %v1014 = vpack.c.b16 %v1011, %v1010
        %v1015 = vpack.c.b16 %v1013, %v1012
        %v1017 = vsel %vm357, %v1014, 0
        %v1020 = vsel %vm357, %v1015, 0
        %1022 = vmatpush.bf16.msra.mxu0 0
        %1023 = vmatpush.bf16.msra.mxu0 0
        %1024 = vmatpush.bf16.msra.mxu0 0
        %1025 = vmatpush.bf16.msra.mxu0 0
        %1026 = vmatpush.bf16.msra.mxu0 0
        %1027 = vmatpush.bf16.msra.mxu0 0
        %1028 = vmatpush.bf16.msra.mxu0 %v981
        %1029 = vmatpush.bf16.msra.mxu0 %v980
        %1030 = vmatmul.bf16.gmra.mxu0 %v1017
        %v1031 = vpop.f32.mrf.mxu0
        %v1032 = vadd.f32 %v989, %v1031
        %v1033 = vpop.f32.mrf.mxu0
        %v1034 = vadd.f32 %v994, %v1033
        %1035 = vmatmul.bf16.gmra.mxu0 %v1020
        %v1036 = vpop.f32.mrf.mxu0
        %v1037 = vadd.f32 %v999, %v1036
        %v1038 = vpop.f32.mrf.mxu0
        %v1039 = vadd.f32 %v1004, %v1038
        %1040 = vdwg.mxu0
        %v1041 = vadd.f32 %v1032, %v332
        %v1042 = vadd.f32 %v1034, %v333
        %v1043 = vadd.f32 %v1037, %v334
        %v1044 = vadd.f32 %v1039, %v335
        %1045 = vst [vmem:[%s325] sm:$0xff] %v1041
        %1046 = vst [vmem:[%s325 + $0x8] sm:$0xff] %v1042
        %1047 = vst [vmem:[%s325 + $0x10] sm:$0xff] %v1043
        %1048 = vst [vmem:[%s325 + $0x18] sm:$0xff] %v1044
        %s1049 = sand.u32 %s225, 1
        %s1050 = scalar_lea.sflag [#allocation3], %s1049
        %s1051 = sand.u32 %s225, 1
        %s1052 = smul.addr %s1051, 32
        %s1053 = scalar_lea.vmem [#allocation2], %s1052
        // Predicated region
        $region57: #{tpu_custom_call.1} parent=55 // pred_check
          %p1054 = pneg %p235
        $region58: #{tpu_custom_call.1} parent=55 // pred_check_branch
          %1056 = sbr.rel (%p1054) target = $region60
        $region59: #{tpu_custom_call.1} parent=55 // pred_region
          %1058 = vsyncadd %s1050, 0
          %s1059 = smul.addr %s23, 4
          %s1060 = smul.addr %s1059, 8
          %s1061 = scalar_lea.hbm %s9, %s1060
          %s1062 = sshll.u32 %s1053, 4
          %s1063 = int_to_ptr.vmem [resolvable:$true] %s1062
          %s1064 = sshll.u32 %s1061, 4
          %s1065 = int_to_ptr.hbm [resolvable:$true] %s1064
          %1070 = dma.vmem_to_hbm [thread:$0]  %s1063, 512, %s1065, %s1050, 128, 128, 8
        $region60: #{tpu_custom_call.1} parent=55 // pred_fallthru
          _
      $region56: #{tpu_custom_call.1} parent=5 // pred_fallthru
        _
      %p1071 = scmp.le.s32.totalorder 2, %s18
      // Predicated region
      $region61: #{tpu_custom_call.1} parent=5 // pred_check
        %p1072 = pneg %p1071
      $region62: #{tpu_custom_call.1} parent=5 // pred_check_branch
        %1074 = sbr.rel (%p1072) target = $region64
      $region63: #{tpu_custom_call.1} parent=5 // pred_region
        %s1075 = ssub.s32 %s18, 2
        // Predicated region
        $region65: #{tpu_custom_call.1} parent=63 // pred_check
          %p1076 = pneg %p241
        $region66: #{tpu_custom_call.1} parent=63 // pred_check_branch
          %1078 = sbr.rel (%p1076) target = $region68
        $region67: #{tpu_custom_call.1} parent=63 // pred_region
          %s1079 = sand.u32 %s226, 1
          %s1080 = scalar_lea.sflag [#allocation3], %s1079
          %s1081 = sand.u32 %s226, 1
          %s1082 = smul.addr %s1081, 32
          %s1083 = scalar_lea.vmem [#allocation2], %s1082
          %1085 = dma.done %s1080, 512
        $region68: #{tpu_custom_call.1} parent=63 // pred_fallthru
          _
      $region64: #{tpu_custom_call.1} parent=5 // pred_fallthru
        _
    $region6: #{tpu_custom_call.1} parent=1 // loop_footer
      %s22 = sadd.s32 1, %s18
    $region7: #{tpu_custom_call.1} parent=1 // loop_footer_branch
      %17 = sbr.rel target = $region3
    $region8: #{tpu_custom_call.1} parent=1 // loop_exit
      _
    %1086 = vsyncpa [#allocation3], 1
    %s1087 = scalar_lea.sflag [#allocation3], 1
    %1088 = vsyncpa %s1087, 1

</llo_original>
